<compile_context>
chip_gen: v5e
topology: v5e:2x2
jax: 0.10.0
libtpu: 0.0.40
codegen_flags: <defaults>
</compile_context>

<pallas_src>
import functools

import jax
import jax.numpy as jnp
from jax import lax
from jax.experimental import pallas as pl
from jax.experimental.pallas import tpu as pltpu

BN_EPS = 1e-5
LEAKY_SLOPE = 0.1
VMEM_LIMIT_BYTES = 32 * 1024 * 1024


def _round_up(x, m):
    return (x + m - 1) // m * m


def _cdiv(a, b):
    return (a + b - 1) // b


# --------------------------------------------------------------------------
# Pass 1: conv matmul (bf16 MXU) + cross-tile BatchNorm statistics
# --------------------------------------------------------------------------
def _conv_stats_kernel(patches_ref, w_ref, gamma_ref, beta_ref,
                       conv_ref, scale_ref, shift_ref,
                       sum_ref, sumsq_ref, *, inv_count, m_total, tm):
    i = pl.program_id(1)                      # M tile (inner, "arbitrary")

    @pl.when(i == 0)
    def _init():
        sum_ref[...] = jnp.zeros_like(sum_ref)
        sumsq_ref[...] = jnp.zeros_like(sumsq_ref)

    # MXU matmul: narrow (bf16) operands, f32 accumulation.
    conv = jnp.dot(patches_ref[...], w_ref[...],
                   preferred_element_type=jnp.float32)          # (tm, tn) f32

    # Mask the ragged last M tile (static no-op when tm | M) so out-of-range
    # rows contribute nothing to the batch statistics or the stored tile.
    if m_total % tm != 0:
        rows = i * tm + lax.broadcasted_iota(jnp.int32, conv.shape, 0)
        conv = jnp.where(rows < m_total, conv, 0.0)

    # Store the conv intermediate in the narrow compute dtype (halves the
    # dominant HBM write here and the read in pass 2).
    conv_ref[...] = conv.astype(conv_ref.dtype)

    # Per-channel sum / sum-of-squares via ones-row MXU matmuls (keeps the
    # axis-0 reductions off the VPU / store slots); stats stay f32.
    ones_row = jnp.ones((1, conv.shape[0]), jnp.float32)
    sum_ref[...] += jnp.dot(ones_row, conv, preferred_element_type=jnp.float32)
    sumsq_ref[...] += jnp.dot(ones_row, conv * conv,
                              preferred_element_type=jnp.float32)

    @pl.when(i == pl.num_programs(1) - 1)
    def _finalize():
        mean = sum_ref[...] * inv_count
        var = sumsq_ref[...] * inv_count - mean * mean          # biased var
        var = jnp.maximum(var, 0.0)                             # cancellation guard
        inv_std = lax.rsqrt(var + BN_EPS)
        scale = gamma_ref[...] * inv_std
        scale_ref[...] = scale
        shift_ref[...] = beta_ref[...] - mean * scale


# --------------------------------------------------------------------------
# Pass 2: BN affine + LeakyReLU(0.1), NCHW emitted directly from the kernel
# --------------------------------------------------------------------------
def _bn_lrelu_nchw_kernel(conv_ref, scale_ref, shift_ref, o_ref):
    cout = o_ref.shape[1]
    x = conv_ref[0].astype(jnp.float32)                  # (tr, Cp)
    y = x * scale_ref[...] + shift_ref[...]              # fused BN multiply-add
    y = jnp.where(y >= 0, y, LEAKY_SLOPE * y)            # LeakyReLU(0.1)
    # Fold the NHWC -> NCHW relayout into the store: one in-VMEM transpose
    # instead of a full extra HBM round trip in the wrapper.
    o_ref[0] = y.T[:cout].astype(o_ref.dtype)            # (Cout, tr)


# --------------------------------------------------------------------------
# im2col (wrapper-side): (N,Cin,H,W) -> (N*OH*OW, Cin*KH*KW); feature order
# matches PyTorch weight.reshape(Cout, Cin*KH*KW): idx = c*(KH*KW) + kh*KW + kw
# --------------------------------------------------------------------------
def _im2col(x, KH, KW, stride, padding):
    N, Cin, H, W = x.shape
    OH = (H + 2 * padding - KH) // stride + 1
    OW = (W + 2 * padding - KW) // stride + 1
    xp = jnp.pad(x, ((0, 0), (0, 0), (padding, padding), (padding, padding)))
    taps = [
        xp[:, :, kh:kh + OH * stride:stride, kw:kw + OW * stride:stride]
        for kh in range(KH) for kw in range(KW)
    ]                                                   # each (N, Cin, OH, OW)
    pats = jnp.stack(taps, axis=2)                      # (N, Cin, KH*KW, OH, OW)
    pats = pats.transpose(0, 3, 4, 1, 2)                # (N, OH, OW, Cin, KH*KW)
    return pats.reshape(N * OH * OW, Cin * KH * KW), OH, OW


def cnn_block(x, weight, gamma, beta, *, stride=1, padding=1,
              compute_dtype=jnp.bfloat16, tm=512):
    """x: (N, Cin, H, W), weight: (Cout, Cin, KH, KW), gamma/beta: (Cout,).

    Returns (N, Cout, OH, OW) in x.dtype (NCHW, like the PyTorch module).
    """
    N, Cin, H, W = x.shape
    Cout, Cin_w, KH, KW = weight.shape
    assert Cin == Cin_w

    # Cast BEFORE im2col so the (M, Kdim) patch matrix is materialized once,
    # already in the narrow compute dtype, with no extra pad copy.
    patches, OH, OW = _im2col(x.astype(compute_dtype), KH, KW, stride, padding)
    M, Kdim = patches.shape
    OHW = OH * OW

    Cp = _round_up(Cout, 128)                 # lane-dense channel dim
    tn = 256 if Cp % 256 == 0 else 128        # Cout tile (256 = v6e/v7x MXU width)
    n_ct = Cp // tn

    tm1 = min(tm, _round_up(M, 8))            # pass-1 row tile
    n_mt = _cdiv(M, tm1)

    # Small operands: pad / transpose / cast in the wrapper (negligible traffic).
    w_p = jnp.pad(weight.reshape(Cout, Cin * KH * KW).T,
                  ((0, 0), (0, Cp - Cout))).astype(compute_dtype)   # (Kdim, Cp)
    gamma_p = jnp.pad(gamma.astype(jnp.float32).reshape(1, Cout),
                      ((0, 0), (0, Cp - Cout)))
    beta_p = jnp.pad(beta.astype(jnp.float32).reshape(1, Cout),
                     ((0, 0), (0, Cp - Cout)))

    # ---- pass 1: conv matmul + global BN stats -> folded scale/shift ----
    conv_nar, scale, shift = pl.pallas_call(
        functools.partial(_conv_stats_kernel, inv_count=1.0 / M,
                          m_total=M, tm=tm1),
        out_shape=(
            jax.ShapeDtypeStruct((M, Cp), compute_dtype),   # conv activations
            jax.ShapeDtypeStruct((1, Cp), jnp.float32),     # folded scale
            jax.ShapeDtypeStruct((1, Cp), jnp.float32),     # folded shift
        ),
        grid_spec=pltpu.PrefetchScalarGridSpec(
            num_scalar_prefetch=0,
            grid=(n_ct, n_mt),
            in_specs=[
                pl.BlockSpec((tm1, Kdim), lambda j, i: (i, 0)),   # patches
                pl.BlockSpec((Kdim, tn), lambda j, i: (0, j)),    # weight
                pl.BlockSpec((1, tn), lambda j, i: (0, j)),       # gamma
                pl.BlockSpec((1, tn), lambda j, i: (0, j)),       # beta
            ],
            out_specs=(
                pl.BlockSpec((tm1, tn), lambda j, i: (i, j)),
                pl.BlockSpec((1, tn), lambda j, i: (0, j)),
                pl.BlockSpec((1, tn), lambda j, i: (0, j)),
            ),
            scratch_shapes=[pltpu.VMEM((1, tn), jnp.float32),   # running sum
                            pltpu.VMEM((1, tn), jnp.float32)],  # running sumsq
        ),
        compiler_params=pltpu.CompilerParams(
            dimension_semantics=("parallel", "arbitrary"),
            vmem_limit_bytes=VMEM_LIMIT_BYTES),
    )(patches, w_p, gamma_p, beta_p)

    # ---- pass 2: fused (conv*scale + shift) + LeakyReLU, emits NCHW ----
    conv3 = conv_nar.reshape(N, OHW, Cp)       # metadata-only reshape

    if OHW <= 128:
        tr = OHW                               # full-dim block (always legal)
    else:
        tr_target = 512 if Cp > 512 else 1024  # big mem-bound tiles
        tr = min(tr_target, (OHW // 128) * 128)
    n_rt = _cdiv(OHW, tr)

    out3 = pl.pallas_call(
        _bn_lrelu_nchw_kernel,
        out_shape=jax.ShapeDtypeStruct((N, Cout, OHW), x.dtype),
        grid_spec=pltpu.PrefetchScalarGridSpec(
            num_scalar_prefetch=0,
            grid=(N, n_rt),
            in_specs=[
                pl.BlockSpec((1, tr, Cp), lambda n, r: (n, r, 0)),
                pl.BlockSpec((1, Cp), lambda n, r: (0, 0)),
                pl.BlockSpec((1, Cp), lambda n, r: (0, 0)),
            ],
            out_specs=pl.BlockSpec((1, Cout, tr), lambda n, r: (n, 0, r)),
        ),
        compiler_params=pltpu.CompilerParams(
            dimension_semantics=("parallel", "parallel"),
            vmem_limit_bytes=VMEM_LIMIT_BYTES),
    )(conv3, scale, shift)

    return out3.reshape(N, Cout, OH, OW)       # metadata-only reshape


def _reference(x, weight, gamma, beta, *, stride=1, padding=1):
    # Pure-JAX reference: conv + training-mode batchnorm + leaky relu (f32).
    conv = lax.conv_general_dilated(
        x, weight, (stride, stride),
        [(padding, padding), (padding, padding)],
        dimension_numbers=("NCHW", "OIHW", "NCHW"),
    )
    mean = jnp.mean(conv, axis=(0, 2, 3), keepdims=True)
    var = jnp.mean((conv - mean) ** 2, axis=(0, 2, 3), keepdims=True)
    y = (conv - mean) * lax.rsqrt(var + BN_EPS)
    y = y * gamma.reshape(1, -1, 1, 1) + beta.reshape(1, -1, 1, 1)
    return jnp.where(y >= 0, y, LEAKY_SLOPE * y)


if __name__ == "__main__":
    key = jax.random.PRNGKey(0)
    k_x, k_w, k_g, k_b = jax.random.split(key, 4)

    N, Cin, H, W = 2, 4, 16, 16
    Cout, KH, KW = 8, 3, 3
    stride, padding = 1, 1

    x = jax.random.normal(k_x, (N, Cin, H, W), dtype=jnp.float32)
    fan_in = Cin * KH * KW
    weight = jax.random.normal(k_w, (Cout, Cin, KH, KW), dtype=jnp.float32) / jnp.sqrt(fan_in)
    gamma = 1.0 + 0.1 * jax.random.normal(k_g, (Cout,), dtype=jnp.float32)
    beta = 0.1 * jax.random.normal(k_b, (Cout,), dtype=jnp.float32)

    out = cnn_block(x, weight, gamma, beta, stride=stride, padding=padding)
    out = jax.block_until_ready(out)

    ref = _reference(x, weight, gamma, beta, stride=stride, padding=padding)
    assert out.shape == (N, Cout, H, W)
    # bf16 MXU operands + bf16 conv intermediate -> compare at bf16-level tolerance.
    assert jnp.allclose(out, ref, atol=5e-2, rtol=5e-2), "mismatch vs reference"

    print("KERNEL_OK")
</pallas_src>

<mosaic_0001>
module attributes {stable_mosaic.version = 11 : i64} {
  func.func @_conv_stats_kernel(%arg0: i32, %arg1: i32, %arg2: memref<512x36xbf16, #tpu.memory_space<vmem>>, %arg3: memref<36x128xbf16, #tpu.memory_space<vmem>>, %arg4: memref<1x128xf32, #tpu.memory_space<vmem>>, %arg5: memref<1x128xf32, #tpu.memory_space<vmem>>, %arg6: memref<512x128xbf16, #tpu.memory_space<vmem>>, %arg7: memref<1x128xf32, #tpu.memory_space<vmem>>, %arg8: memref<1x128xf32, #tpu.memory_space<vmem>>, %arg9: memref<1x128xf32, #tpu.memory_space<vmem>>, %arg10: memref<1x128xf32, #tpu.memory_space<vmem>>) attributes {dimension_semantics = [#tpu.dimension_semantics<parallel>, #tpu.dimension_semantics<arbitrary>], iteration_bounds = array<i64: 1, 1>, scalar_prefetch = 0 : i64, scratch_operands = 2 : i64, tpu.core_type = #tpu.core_type<tc>, window_params = [{transform_indices = @transform_0, window_bounds = array<i64: 512, 36>}, {transform_indices = @transform_1, window_bounds = array<i64: 36, 128>}, {transform_indices = @transform_2, window_bounds = array<i64: 1, 128>}, {transform_indices = @transform_3, window_bounds = array<i64: 1, 128>}, {transform_indices = @transform_4, window_bounds = array<i64: 512, 128>}, {transform_indices = @transform_5, window_bounds = array<i64: 1, 128>}, {transform_indices = @transform_6, window_bounds = array<i64: 1, 128>}]} {
    %c0_i32 = arith.constant 0 : i32
    %0 = arith.cmpi eq, %arg1, %c0_i32 : i32
    %1 = arith.extui %0 : i1 to i32
    %c0_i32_0 = arith.constant 0 : i32
    %2 = arith.cmpi ne, %1, %c0_i32_0 : i32
    scf.if %2 {
      %cst_19 = arith.constant 0.000000e+00 : f32
      %21 = vector.broadcast %cst_19 : f32 to vector<1x128xf32>
      %c0_20 = arith.constant 0 : index
      %c0_21 = arith.constant 0 : index
      %22 = vector.load %arg9[%c0_20, %c0_21] : memref<1x128xf32, #tpu.memory_space<vmem>>, vector<1x128xf32>
      tpu.vector_store %arg9[%c0_20, %c0_21], %21 {strides = array<i32>} : memref<1x128xf32, #tpu.memory_space<vmem>>, vector<1x128xf32>,
      %cst_22 = arith.constant 0.000000e+00 : f32
      %23 = vector.broadcast %cst_22 : f32 to vector<1x128xf32>
      %c0_23 = arith.constant 0 : index
      %c0_24 = arith.constant 0 : index
      %24 = vector.load %arg10[%c0_23, %c0_24] : memref<1x128xf32, #tpu.memory_space<vmem>>, vector<1x128xf32>
      tpu.vector_store %arg10[%c0_23, %c0_24], %23 {strides = array<i32>} : memref<1x128xf32, #tpu.memory_space<vmem>>, vector<1x128xf32>,
    } else {
    }
    %c0 = arith.constant 0 : index
    %c0_1 = arith.constant 0 : index
    %3 = vector.load %arg2[%c0, %c0_1] : memref<512x36xbf16, #tpu.memory_space<vmem>>, vector<512x36xbf16>
    %c0_2 = arith.constant 0 : index
    %c0_3 = arith.constant 0 : index
    %4 = vector.load %arg3[%c0_2, %c0_3] : memref<36x128xbf16, #tpu.memory_space<vmem>>, vector<36x128xbf16>
    %cst = arith.constant dense<0.000000e+00> : vector<512x128xf32>
    %5 = tpu.matmul %3, %4, %cst {dimension_numbers = #tpu.dot_dimension_numbers<[1], [0], [0], [1], [0, 0, 1, 1], [], []>} : vector<512x36xbf16>, vector<36x128xbf16>, vector<512x128xf32> -> vector<512x128xf32>
    %6 = arith.truncf %5 : vector<512x128xf32> to vector<512x128xbf16>
    %c0_4 = arith.constant 0 : index
    %c0_5 = arith.constant 0 : index
    %7 = vector.load %arg6[%c0_4, %c0_5] : memref<512x128xbf16, #tpu.memory_space<vmem>>, vector<512x128xbf16>
    tpu.vector_store %arg6[%c0_4, %c0_5], %6 {strides = array<i32>} : memref<512x128xbf16, #tpu.memory_space<vmem>>, vector<512x128xbf16>,
    %cst_6 = arith.constant 1.000000e+00 : f32
    %8 = vector.broadcast %cst_6 : f32 to vector<1x512xf32>
    %c0_7 = arith.constant 0 : index
    %c0_8 = arith.constant 0 : index
    %9 = vector.load %arg9[%c0_7, %c0_8] : memref<1x128xf32, #tpu.memory_space<vmem>>, vector<1x128xf32>
    %cst_9 = arith.constant dense<0.000000e+00> : vector<1x128xf32>
    %10 = tpu.matmul %8, %5, %cst_9 {dimension_numbers = #tpu.dot_dimension_numbers<[1], [0], [0], [1], [0, 0, 1, 1], [], []>} : vector<1x512xf32>, vector<512x128xf32>, vector<1x128xf32> -> vector<1x128xf32>
    %11 = arith.addf %9, %10 : vector<1x128xf32>
    %c0_10 = arith.constant 0 : index
    %c0_11 = arith.constant 0 : index
    %12 = vector.load %arg9[%c0_10, %c0_11] : memref<1x128xf32, #tpu.memory_space<vmem>>, vector<1x128xf32>
    tpu.vector_store %arg9[%c0_10, %c0_11], %11 {strides = array<i32>} : memref<1x128xf32, #tpu.memory_space<vmem>>, vector<1x128xf32>,
    %c0_12 = arith.constant 0 : index
    %c0_13 = arith.constant 0 : index
    %13 = vector.load %arg10[%c0_12, %c0_13] : memref<1x128xf32, #tpu.memory_space<vmem>>, vector<1x128xf32>
    %14 = arith.mulf %5, %5 : vector<512x128xf32>
    %cst_14 = arith.constant dense<0.000000e+00> : vector<1x128xf32>
    %15 = tpu.matmul %8, %14, %cst_14 {dimension_numbers = #tpu.dot_dimension_numbers<[1], [0], [0], [1], [0, 0, 1, 1], [], []>} : vector<1x512xf32>, vector<512x128xf32>, vector<1x128xf32> -> vector<1x128xf32>
    %16 = arith.addf %13, %15 : vector<1x128xf32>
    %c0_15 = arith.constant 0 : index
    %c0_16 = arith.constant 0 : index
    %17 = vector.load %arg10[%c0_15, %c0_16] : memref<1x128xf32, #tpu.memory_space<vmem>>, vector<1x128xf32>
    tpu.vector_store %arg10[%c0_15, %c0_16], %16 {strides = array<i32>} : memref<1x128xf32, #tpu.memory_space<vmem>>, vector<1x128xf32>,
    %c0_i32_17 = arith.constant 0 : i32
    %18 = arith.cmpi eq, %arg1, %c0_i32_17 : i32
    %19 = arith.extui %18 : i1 to i32
    %c0_i32_18 = arith.constant 0 : i32
    %20 = arith.cmpi ne, %19, %c0_i32_18 : i32
    scf.if %20 {
      %c0_19 = arith.constant 0 : index
      %c0_20 = arith.constant 0 : index
      %21 = vector.load %arg9[%c0_19, %c0_20] : memref<1x128xf32, #tpu.memory_space<vmem>>, vector<1x128xf32>
      %cst_21 = arith.constant 0.001953125 : f32
      %22 = vector.broadcast %cst_21 : f32 to vector<1x128xf32>
      %23 = arith.mulf %21, %22 : vector<1x128xf32>
      %c0_22 = arith.constant 0 : index
      %c0_23 = arith.constant 0 : index
      %24 = vector.load %arg10[%c0_22, %c0_23] : memref<1x128xf32, #tpu.memory_space<vmem>>, vector<1x128xf32>
      %cst_24 = arith.constant 0.001953125 : f32
      %25 = vector.broadcast %cst_24 : f32 to vector<1x128xf32>
      %26 = arith.mulf %24, %25 : vector<1x128xf32>
      %27 = arith.mulf %23, %23 : vector<1x128xf32>
      %28 = arith.subf %26, %27 : vector<1x128xf32>
      %cst_25 = arith.constant 0.000000e+00 : f32
      %29 = vector.broadcast %cst_25 : f32 to vector<1x128xf32>
      %30 = arith.maximumf %28, %29 : vector<1x128xf32>
      %cst_26 = arith.constant 9.99999974E-6 : f32
      %31 = vector.broadcast %cst_26 : f32 to vector<1x128xf32>
      %32 = arith.addf %30, %31 : vector<1x128xf32>
      %33 = math.rsqrt %32 : vector<1x128xf32>
      %c0_27 = arith.constant 0 : index
      %c0_28 = arith.constant 0 : index
      %34 = vector.load %arg4[%c0_27, %c0_28] : memref<1x128xf32, #tpu.memory_space<vmem>>, vector<1x128xf32>
      %35 = arith.mulf %34, %33 : vector<1x128xf32>
      %c0_29 = arith.constant 0 : index
      %c0_30 = arith.constant 0 : index
      %36 = vector.load %arg7[%c0_29, %c0_30] : memref<1x128xf32, #tpu.memory_space<vmem>>, vector<1x128xf32>
      tpu.vector_store %arg7[%c0_29, %c0_30], %35 {strides = array<i32>} : memref<1x128xf32, #tpu.memory_space<vmem>>, vector<1x128xf32>,
      %c0_31 = arith.constant 0 : index
      %c0_32 = arith.constant 0 : index
      %37 = vector.load %arg5[%c0_31, %c0_32] : memref<1x128xf32, #tpu.memory_space<vmem>>, vector<1x128xf32>
      %38 = arith.mulf %23, %35 : vector<1x128xf32>
      %39 = arith.subf %37, %38 : vector<1x128xf32>
      %c0_33 = arith.constant 0 : index
      %c0_34 = arith.constant 0 : index
      %40 = vector.load %arg8[%c0_33, %c0_34] : memref<1x128xf32, #tpu.memory_space<vmem>>, vector<1x128xf32>
      tpu.vector_store %arg8[%c0_33, %c0_34], %39 {strides = array<i32>} : memref<1x128xf32, #tpu.memory_space<vmem>>, vector<1x128xf32>,
    } else {
    }
    return
  }
  func.func @transform_0(%arg0: i32, %arg1: i32) -> (i32, i32) {
    %c0_i32 = arith.constant 0 : i32
    %c0_i32_0 = arith.constant 0 : i32
    return %arg1, %c0_i32 : i32, i32
  }
  func.func @transform_1(%arg0: i32, %arg1: i32) -> (i32, i32) {
    %c0_i32 = arith.constant 0 : i32
    %c0_i32_0 = arith.constant 0 : i32
    return %c0_i32, %arg0 : i32, i32
  }
  func.func @transform_2(%arg0: i32, %arg1: i32) -> (i32, i32) {
    %c0_i32 = arith.constant 0 : i32
    %c0_i32_0 = arith.constant 0 : i32
    return %c0_i32, %arg0 : i32, i32
  }
  func.func @transform_3(%arg0: i32, %arg1: i32) -> (i32, i32) {
    %c0_i32 = arith.constant 0 : i32
    %c0_i32_0 = arith.constant 0 : i32
    return %c0_i32, %arg0 : i32, i32
  }
  func.func @transform_4(%arg0: i32, %arg1: i32) -> (i32, i32) {
    %c0_i32 = arith.constant 0 : i32
    return %arg1, %arg0 : i32, i32
  }
  func.func @transform_5(%arg0: i32, %arg1: i32) -> (i32, i32) {
    %c0_i32 = arith.constant 0 : i32
    %c0_i32_0 = arith.constant 0 : i32
    return %c0_i32, %arg0 : i32, i32
  }
  func.func @transform_6(%arg0: i32, %arg1: i32) -> (i32, i32) {
    %c0_i32 = arith.constant 0 : i32
    %c0_i32_0 = arith.constant 0 : i32
    return %c0_i32, %arg0 : i32, i32
  }
}

</mosaic_0001>

<llo_original>
// kernel: tpu_custom_call.1
$region0: #{tpu_custom_call.1}
  #allocation0 [shape = 'u32[]', space=smem, size = 0x4, offset = 0x4, fixed_abs, tag = 'smem constant byte address 0x4 - core index']
  #allocation1 [shape = 'u32[72,128]{1,0:T(1,128)}', space=vmem, size = 0x9000, scoped, tag = 'internal scratch']
  #allocation2 [shape = 'f32[1,128]{1,0:T(1,128)}', space=vmem, size = 0x200, scoped, tag = 'scratch operand']
  #allocation3 [shape = 'f32[1,128]{1,0:T(1,128)}', space=vmem, size = 0x200, scoped, tag = 'scratch operand']
  %s0 = inlined_call_operand.vmem [shape: bf16[512,36], index: 0, kind: input, shape index: {}]
  %s1 = inlined_call_operand.vmem [shape: bf16[36,128], index: 1, kind: input, shape index: {}]
  %s2 = inlined_call_operand.vmem [shape: f32[1,128], index: 2, kind: input, shape index: {}]
  %s3 = inlined_call_operand.vmem [shape: f32[1,128], index: 3, kind: input, shape index: {}]
  %s4 = inlined_call_operand.hbm [shape: bf16[512,128], index: 4, kind: output, shape index: {0}]
  %s5 = inlined_call_operand.hbm [shape: f32[1,128], index: 5, kind: output, shape index: {1}]
  %s6 = inlined_call_operand.hbm [shape: f32[1,128], index: 6, kind: output, shape index: {2}]
  %7 = xla_tuple %s4, %s5, %s6
  %s8 = sld [smem:[#allocation0]]
  $region50: #{tpu_custom_call.1} parent=0
    _
  %s10 = ssub.s32 1, %s8
  %s11 = scalar_select 0, %s10, %s8
  $region1: #{tpu_custom_call.1} parent=0
    #allocation4 [shape = 'u8[131072]{0}', space=vmem, size = 0x20000, scoped, tag = 'output window, operand 0, single buffered']
    #allocation5 [shape = 's32[1]{0}', space=sflag, size = 0x4, scoped, tag = 'scoped memory for tpu_custom_call.1']
    #allocation6 [shape = 'u8[512]{0}', space=vmem, size = 0x400, scoped, tag = 'output window, operand 1, single buffered']
    #allocation7 [shape = 's32[1]{0}', space=sflag, size = 0x4, scoped, tag = 'scoped memory for tpu_custom_call.1']
    #allocation8 [shape = 'u8[512]{0}', space=vmem, size = 0x400, scoped, tag = 'output window, operand 2, single buffered']
    %12 = vsyncpa [#allocation5], 0
    %13 = vsyncpa [#allocation7], 0
    // Predicated region
    $region2: #{tpu_custom_call.1} parent=1 // pred_check
      _
    $region3: #{tpu_custom_call.1} parent=1 // pred_check_branch
      %15 = sbr.rel (0) target = $region5
    $region4: #{tpu_custom_call.1} parent=1 // pred_region
      _
    $region5: #{tpu_custom_call.1} parent=1 // pred_fallthru
      _
    // Predicated region
    $region6: #{tpu_custom_call.1} parent=1 // pred_check
      _
    $region7: #{tpu_custom_call.1} parent=1 // pred_check_branch
      %17 = sbr.rel (0) target = $region9
    $region8: #{tpu_custom_call.1} parent=1 // pred_region
      _
    $region9: #{tpu_custom_call.1} parent=1 // pred_fallthru
      _
    // Predicated region
    $region10: #{tpu_custom_call.1} parent=1 // pred_check
      _
    $region11: #{tpu_custom_call.1} parent=1 // pred_check_branch
      %19 = sbr.rel (0) target = $region13
    $region12: #{tpu_custom_call.1} parent=1 // pred_region
      _
    $region13: #{tpu_custom_call.1} parent=1 // pred_fallthru
      _
    // Predicated region
    $region14: #{tpu_custom_call.1} parent=1 // pred_check
      _
    $region15: #{tpu_custom_call.1} parent=1 // pred_check_branch
      %21 = sbr.rel (0) target = $region17
    $region16: #{tpu_custom_call.1} parent=1 // pred_region
      _
    $region17: #{tpu_custom_call.1} parent=1 // pred_fallthru
      _
    %p23 = scmp.eq.s32.totalorder 0, 0
    // Predicated region
    $region18: #{tpu_custom_call.1} parent=1 // pred_check
      %p24 = pneg %p23
    $region19: #{tpu_custom_call.1} parent=1 // pred_check_branch
      %26 = sbr.rel (%p24) target = $region21
    $region20: #{tpu_custom_call.1} parent=1 // pred_region
      %27 = vst [vmem:[#allocation2] sm:$0x1] 0.0
      %28 = vst [vmem:[#allocation3] sm:$0x1] 0.0
    $region21: #{tpu_custom_call.1} parent=1 // pred_fallthru
      _
    %v29 = vld [vmem:[%s0] sm:$0xf]
    %v30 = vld [vmem:[%s0 + $0x4] sm:$0xf]
    %v31 = vld [vmem:[%s0 + $0x8] sm:$0xf]
    %v32 = vld [vmem:[%s0 + $0xc] sm:$0xf]
    %v33 = vld [vmem:[%s0 + $0x10] sm:$0xf]
    %v34 = vld [vmem:[%s0 + $0x14] sm:$0xf]
    %v35 = vld [vmem:[%s0 + $0x18] sm:$0xf]
    %v36 = vld [vmem:[%s0 + $0x1c] sm:$0xf]
    %v37 = vld [vmem:[%s0 + $0x20] sm:$0xf]
    %v38 = vld [vmem:[%s0 + $0x24] sm:$0xf]
    %v39 = vld [vmem:[%s0 + $0x28] sm:$0xf]
    %v40 = vld [vmem:[%s0 + $0x2c] sm:$0xf]
    %v41 = vld [vmem:[%s0 + $0x30] sm:$0xf]
    %v42 = vld [vmem:[%s0 + $0x34] sm:$0xf]
    %v43 = vld [vmem:[%s0 + $0x38] sm:$0xf]
    %v44 = vld [vmem:[%s0 + $0x3c] sm:$0xf]
    %v45 = vld [vmem:[%s0 + $0x40] sm:$0xf]
    %v46 = vld [vmem:[%s0 + $0x44] sm:$0xf]
    %v47 = vld [vmem:[%s0 + $0x48] sm:$0xf]
    %v48 = vld [vmem:[%s0 + $0x4c] sm:$0xf]
    %v49 = vld [vmem:[%s0 + $0x50] sm:$0xf]
    %v50 = vld [vmem:[%s0 + $0x54] sm:$0xf]
    %v51 = vld [vmem:[%s0 + $0x58] sm:$0xf]
    %v52 = vld [vmem:[%s0 + $0x5c] sm:$0xf]
    %v53 = vld [vmem:[%s0 + $0x60] sm:$0xf]
    %v54 = vld [vmem:[%s0 + $0x64] sm:$0xf]
    %v55 = vld [vmem:[%s0 + $0x68] sm:$0xf]
    %v56 = vld [vmem:[%s0 + $0x6c] sm:$0xf]
    %v57 = vld [vmem:[%s0 + $0x70] sm:$0xf]
    %v58 = vld [vmem:[%s0 + $0x74] sm:$0xf]
    %v59 = vld [vmem:[%s0 + $0x78] sm:$0xf]
    %v60 = vld [vmem:[%s0 + $0x7c] sm:$0xf]
    %v61 = vld [vmem:[%s0 + $0x80] sm:$0xf]
    %v62 = vld [vmem:[%s0 + $0x84] sm:$0xf]
    %v63 = vld [vmem:[%s0 + $0x88] sm:$0xf]
    %v64 = vld [vmem:[%s0 + $0x8c] sm:$0xf]
    %v65 = vld [vmem:[%s0 + $0x90] sm:$0xf]
    %v66 = vld [vmem:[%s0 + $0x94] sm:$0xf]
    %v67 = vld [vmem:[%s0 + $0x98] sm:$0xf]
    %v68 = vld [vmem:[%s0 + $0x9c] sm:$0xf]
    %v69 = vld [vmem:[%s0 + $0xa0] sm:$0xf]
    %v70 = vld [vmem:[%s0 + $0xa4] sm:$0xf]
    %v71 = vld [vmem:[%s0 + $0xa8] sm:$0xf]
    %v72 = vld [vmem:[%s0 + $0xac] sm:$0xf]
    %v73 = vld [vmem:[%s0 + $0xb0] sm:$0xf]
    %v74 = vld [vmem:[%s0 + $0xb4] sm:$0xf]
    %v75 = vld [vmem:[%s0 + $0xb8] sm:$0xf]
    %v76 = vld [vmem:[%s0 + $0xbc] sm:$0xf]
    %v77 = vld [vmem:[%s0 + $0xc0] sm:$0xf]
    %v78 = vld [vmem:[%s0 + $0xc4] sm:$0xf]
    %v79 = vld [vmem:[%s0 + $0xc8] sm:$0xf]
    %v80 = vld [vmem:[%s0 + $0xcc] sm:$0xf]
    %v81 = vld [vmem:[%s0 + $0xd0] sm:$0xf]
    %v82 = vld [vmem:[%s0 + $0xd4] sm:$0xf]
    %v83 = vld [vmem:[%s0 + $0xd8] sm:$0xf]
    %v84 = vld [vmem:[%s0 + $0xdc] sm:$0xf]
    %v85 = vld [vmem:[%s0 + $0xe0] sm:$0xf]
    %v86 = vld [vmem:[%s0 + $0xe4] sm:$0xf]
    %v87 = vld [vmem:[%s0 + $0xe8] sm:$0xf]
    %v88 = vld [vmem:[%s0 + $0xec] sm:$0xf]
    %v89 = vld [vmem:[%s0 + $0xf0] sm:$0xf]
    %v90 = vld [vmem:[%s0 + $0xf4] sm:$0xf]
    %v91 = vld [vmem:[%s0 + $0xf8] sm:$0xf]
    %v92 = vld [vmem:[%s0 + $0xfc] sm:$0xf]
    %v93 = vld [vmem:[%s1] sm:$0xf]
    %v94 = vld [vmem:[%s1 + $0x4] sm:$0xf]
    %v95 = vld [vmem:[%s1 + $0x8] sm:$0xf]
    %v96 = vld [vmem:[%s1 + $0xc] sm:$0xf]
    %v97 = vld [vmem:[%s1 + $0x10] sm:$0x3]
    %v162 = vunpack.c.l.b16 %v29
    %v163 = vunpack.c.l.b16 %v30
    %v164 = vunpack.c.l.b16 %v31
    %v165 = vunpack.c.l.b16 %v32
    %v166 = vunpack.c.l.b16 %v33
    %v167 = vunpack.c.l.b16 %v34
    %v168 = vunpack.c.l.b16 %v35
    %v169 = vunpack.c.l.b16 %v36
    %v170 = vunpack.c.l.b16 %v37
    %v171 = vunpack.c.l.b16 %v38
    %v172 = vunpack.c.l.b16 %v39
    %v173 = vunpack.c.l.b16 %v40
    %v174 = vunpack.c.l.b16 %v41
    %v175 = vunpack.c.l.b16 %v42
    %v176 = vunpack.c.l.b16 %v43
    %v177 = vunpack.c.l.b16 %v44
    %v178 = vunpack.c.l.b16 %v45
    %v179 = vunpack.c.l.b16 %v46
    %v180 = vunpack.c.l.b16 %v47
    %v181 = vunpack.c.l.b16 %v48
    %v182 = vunpack.c.l.b16 %v49
    %v183 = vunpack.c.l.b16 %v50
    %v184 = vunpack.c.l.b16 %v51
    %v185 = vunpack.c.l.b16 %v52
    %v186 = vunpack.c.l.b16 %v53
    %v187 = vunpack.c.l.b16 %v54
    %v188 = vunpack.c.l.b16 %v55
    %v189 = vunpack.c.l.b16 %v56
    %v190 = vunpack.c.l.b16 %v57
    %v191 = vunpack.c.l.b16 %v58
    %v192 = vunpack.c.l.b16 %v59
    %v193 = vunpack.c.l.b16 %v60
    %v194 = vunpack.c.l.b16 %v61
    %v195 = vunpack.c.l.b16 %v62
    %v196 = vunpack.c.l.b16 %v63
    %v197 = vunpack.c.l.b16 %v64
    %v198 = vunpack.c.l.b16 %v65
    %v199 = vunpack.c.l.b16 %v66
    %v200 = vunpack.c.l.b16 %v67
    %v201 = vunpack.c.l.b16 %v68
    %v202 = vunpack.c.l.b16 %v69
    %v203 = vunpack.c.l.b16 %v70
    %v204 = vunpack.c.l.b16 %v71
    %v205 = vunpack.c.l.b16 %v72
    %v206 = vunpack.c.l.b16 %v73
    %v207 = vunpack.c.l.b16 %v74
    %v208 = vunpack.c.l.b16 %v75
    %v209 = vunpack.c.l.b16 %v76
    %v210 = vunpack.c.l.b16 %v77
    %v211 = vunpack.c.l.b16 %v78
    %v212 = vunpack.c.l.b16 %v79
    %v213 = vunpack.c.l.b16 %v80
    %v214 = vunpack.c.l.b16 %v81
    %v215 = vunpack.c.l.b16 %v82
    %v216 = vunpack.c.l.b16 %v83
    %v217 = vunpack.c.l.b16 %v84
    %v218 = vunpack.c.l.b16 %v85
    %v219 = vunpack.c.l.b16 %v86
    %v220 = vunpack.c.l.b16 %v87
    %v221 = vunpack.c.l.b16 %v88
    %v222 = vunpack.c.l.b16 %v89
    %v223 = vunpack.c.l.b16 %v90
    %v224 = vunpack.c.l.b16 %v91
    %v225 = vunpack.c.l.b16 %v92
    %v226 = vpack.c.b16 %v163, %v162
    %v227 = vpack.c.b16 %v165, %v164
    %v228 = vpack.c.b16 %v167, %v166
    %v229 = vpack.c.b16 %v169, %v168
    %v230 = vpack.c.b16 %v171, %v170
    %v231 = vpack.c.b16 %v173, %v172
    %v232 = vpack.c.b16 %v175, %v174
    %v233 = vpack.c.b16 %v177, %v176
    %v234 = vpack.c.b16 %v179, %v178
    %v235 = vpack.c.b16 %v181, %v180
    %v236 = vpack.c.b16 %v183, %v182
    %v237 = vpack.c.b16 %v185, %v184
    %v238 = vpack.c.b16 %v187, %v186
    %v239 = vpack.c.b16 %v189, %v188
    %v240 = vpack.c.b16 %v191, %v190
    %v241 = vpack.c.b16 %v193, %v192
    %v242 = vpack.c.b16 %v195, %v194
    %v243 = vpack.c.b16 %v197, %v196
    %v244 = vpack.c.b16 %v199, %v198
    %v245 = vpack.c.b16 %v201, %v200
    %v246 = vpack.c.b16 %v203, %v202
    %v247 = vpack.c.b16 %v205, %v204
    %v248 = vpack.c.b16 %v207, %v206
    %v249 = vpack.c.b16 %v209, %v208
    %v250 = vpack.c.b16 %v211, %v210
    %v251 = vpack.c.b16 %v213, %v212
    %v252 = vpack.c.b16 %v215, %v214
    %v253 = vpack.c.b16 %v217, %v216
    %v254 = vpack.c.b16 %v219, %v218
    %v255 = vpack.c.b16 %v221, %v220
    %v256 = vpack.c.b16 %v223, %v222
    %v257 = vpack.c.b16 %v225, %v224
    %v263 = vunpack.c.l.b16 %v93
    %v264 = vunpack.c.l.b16 %v94
    %v265 = vunpack.c.l.b16 %v95
    %v266 = vunpack.c.l.b16 %v96
    %v267 = vunpack.c.l.b16 %v97
    %v268 = vpack.c.b16 %v264, %v263
    %v269 = vpack.c.b16 %v266, %v265
    %v270 = vpack.c.b16 %v267, %v267
    %vm273 = vcmask 293888
    %v275 = vsel %vm273, %v226, 0
    %v278 = vsel %vm273, %v227, 0
    %v281 = vsel %vm273, %v228, 0
    %v284 = vsel %vm273, %v229, 0
    %v287 = vsel %vm273, %v230, 0
    %v290 = vsel %vm273, %v231, 0
    %v293 = vsel %vm273, %v232, 0
    %v296 = vsel %vm273, %v233, 0
    %v299 = vsel %vm273, %v234, 0
    %v302 = vsel %vm273, %v235, 0
    %v305 = vsel %vm273, %v236, 0
    %v308 = vsel %vm273, %v237, 0
    %v311 = vsel %vm273, %v238, 0
    %v314 = vsel %vm273, %v239, 0
    %v317 = vsel %vm273, %v240, 0
    %v320 = vsel %vm273, %v241, 0
    %v323 = vsel %vm273, %v242, 0
    %v326 = vsel %vm273, %v243, 0
    %v329 = vsel %vm273, %v244, 0
    %v332 = vsel %vm273, %v245, 0
    %v335 = vsel %vm273, %v246, 0
    %v338 = vsel %vm273, %v247, 0
    %v341 = vsel %vm273, %v248, 0
    %v344 = vsel %vm273, %v249, 0
    %v347 = vsel %vm273, %v250, 0
    %v350 = vsel %vm273, %v251, 0
    %v353 = vsel %vm273, %v252, 0
    %v356 = vsel %vm273, %v253, 0
    %v359 = vsel %vm273, %v254, 0
    %v362 = vsel %vm273, %v255, 0
    %v365 = vsel %vm273, %v256, 0
    %v368 = vsel %vm273, %v257, 0
    %vm370 = vcmask 1041408
    %v372 = vsel %vm370, %v270, 0
    %374 = vmatpush.bf16.msra.mxu0 0
    %375 = vmatpush.bf16.msra.mxu0 0
    %376 = vmatpush.bf16.msra.mxu0 0
    %377 = vmatpush.bf16.msra.mxu0 0
    %378 = vmatpush.bf16.msra.mxu0 0
    %379 = vmatpush.bf16.msra.mxu0 %v372
    %380 = vmatpush.bf16.msra.mxu0 %v269
    %381 = vmatpush.bf16.msra.mxu0 %v268
    %382 = vmatmul.bf16.gmra.mxu0 %v275
    %v383 = vpop.f32.mrf.mxu0
    %v384 = vadd.f32 0.0, %v383
    %v385 = vpop.f32.mrf.mxu0
    %v386 = vadd.f32 0.0, %v385
    %387 = vmatmul.bf16.gmra.mxu0 %v278
    %v388 = vpop.f32.mrf.mxu0
    %v389 = vadd.f32 0.0, %v388
    %v390 = vpop.f32.mrf.mxu0
    %v391 = vadd.f32 0.0, %v390
    %392 = vmatmul.bf16.gmra.mxu0 %v281
    %v393 = vpop.f32.mrf.mxu0
    %v394 = vadd.f32 0.0, %v393
    %v395 = vpop.f32.mrf.mxu0
    %v396 = vadd.f32 0.0, %v395
    %397 = vmatmul.bf16.gmra.mxu0 %v284
    %v398 = vpop.f32.mrf.mxu0
    %v399 = vadd.f32 0.0, %v398
    %v400 = vpop.f32.mrf.mxu0
    %v401 = vadd.f32 0.0, %v400
    %402 = vmatmul.bf16.gmra.mxu0 %v287
    %v403 = vpop.f32.mrf.mxu0
    %v404 = vadd.f32 0.0, %v403
    %v405 = vpop.f32.mrf.mxu0
    %v406 = vadd.f32 0.0, %v405
    %407 = vmatmul.bf16.gmra.mxu0 %v290
    %v408 = vpop.f32.mrf.mxu0
    %v409 = vadd.f32 0.0, %v408
    %v410 = vpop.f32.mrf.mxu0
    %v411 = vadd.f32 0.0, %v410
    %412 = vmatmul.bf16.gmra.mxu0 %v293
    %v413 = vpop.f32.mrf.mxu0
    %v414 = vadd.f32 0.0, %v413
    %v415 = vpop.f32.mrf.mxu0
    %v416 = vadd.f32 0.0, %v415
    %417 = vmatmul.bf16.gmra.mxu0 %v296
    %v418 = vpop.f32.mrf.mxu0
    %v419 = vadd.f32 0.0, %v418
    %v420 = vpop.f32.mrf.mxu0
    %v421 = vadd.f32 0.0, %v420
    %422 = vmatmul.bf16.gmra.mxu0 %v299
    %v423 = vpop.f32.mrf.mxu0
    %v424 = vadd.f32 0.0, %v423
    %v425 = vpop.f32.mrf.mxu0
    %v426 = vadd.f32 0.0, %v425
    %427 = vmatmul.bf16.gmra.mxu0 %v302
    %v428 = vpop.f32.mrf.mxu0
    %v429 = vadd.f32 0.0, %v428
    %v430 = vpop.f32.mrf.mxu0
    %v431 = vadd.f32 0.0, %v430
    %432 = vmatmul.bf16.gmra.mxu0 %v305
    %v433 = vpop.f32.mrf.mxu0
    %v434 = vadd.f32 0.0, %v433
    %v435 = vpop.f32.mrf.mxu0
    %v436 = vadd.f32 0.0, %v435
    %437 = vmatmul.bf16.gmra.mxu0 %v308
    %v438 = vpop.f32.mrf.mxu0
    %v439 = vadd.f32 0.0, %v438
    %v440 = vpop.f32.mrf.mxu0
    %v441 = vadd.f32 0.0, %v440
    %442 = vmatmul.bf16.gmra.mxu0 %v311
    %v443 = vpop.f32.mrf.mxu0
    %v444 = vadd.f32 0.0, %v443
    %v445 = vpop.f32.mrf.mxu0
    %v446 = vadd.f32 0.0, %v445
    %447 = vmatmul.bf16.gmra.mxu0 %v314
    %v448 = vpop.f32.mrf.mxu0
    %v449 = vadd.f32 0.0, %v448
    %v450 = vpop.f32.mrf.mxu0
    %v451 = vadd.f32 0.0, %v450
    %452 = vmatmul.bf16.gmra.mxu0 %v317
    %v453 = vpop.f32.mrf.mxu0
    %v454 = vadd.f32 0.0, %v453
    %v455 = vpop.f32.mrf.mxu0
    %v456 = vadd.f32 0.0, %v455
    %457 = vmatmul.bf16.gmra.mxu0 %v320
    %v458 = vpop.f32.mrf.mxu0
    %v459 = vadd.f32 0.0, %v458
    %v460 = vpop.f32.mrf.mxu0
    %v461 = vadd.f32 0.0, %v460
    %462 = vmatmul.bf16.gmra.mxu0 %v323
    %v463 = vpop.f32.mrf.mxu0
    %v464 = vadd.f32 0.0, %v463
    %v465 = vpop.f32.mrf.mxu0
    %v466 = vadd.f32 0.0, %v465
    %467 = vmatmul.bf16.gmra.mxu0 %v326
    %v468 = vpop.f32.mrf.mxu0
    %v469 = vadd.f32 0.0, %v468
    %v470 = vpop.f32.mrf.mxu0
    %v471 = vadd.f32 0.0, %v470
    %472 = vmatmul.bf16.gmra.mxu0 %v329
    %v473 = vpop.f32.mrf.mxu0
    %v474 = vadd.f32 0.0, %v473
    %v475 = vpop.f32.mrf.mxu0
    %v476 = vadd.f32 0.0, %v475
    %477 = vmatmul.bf16.gmra.mxu0 %v332
    %v478 = vpop.f32.mrf.mxu0
    %v479 = vadd.f32 0.0, %v478
    %v480 = vpop.f32.mrf.mxu0
    %v481 = vadd.f32 0.0, %v480
    %482 = vmatmul.bf16.gmra.mxu0 %v335
    %v483 = vpop.f32.mrf.mxu0
    %v484 = vadd.f32 0.0, %v483
    %v485 = vpop.f32.mrf.mxu0
    %v486 = vadd.f32 0.0, %v485
    %487 = vmatmul.bf16.gmra.mxu0 %v338
    %v488 = vpop.f32.mrf.mxu0
    %v489 = vadd.f32 0.0, %v488
    %v490 = vpop.f32.mrf.mxu0
    %v491 = vadd.f32 0.0, %v490
    %492 = vmatmul.bf16.gmra.mxu0 %v341
    %v493 = vpop.f32.mrf.mxu0
    %v494 = vadd.f32 0.0, %v493
    %v495 = vpop.f32.mrf.mxu0
    %v496 = vadd.f32 0.0, %v495
    %497 = vmatmul.bf16.gmra.mxu0 %v344
    %v498 = vpop.f32.mrf.mxu0
    %v499 = vadd.f32 0.0, %v498
    %v500 = vpop.f32.mrf.mxu0
    %v501 = vadd.f32 0.0, %v500
    %502 = vmatmul.bf16.gmra.mxu0 %v347
    %v503 = vpop.f32.mrf.mxu0
    %v504 = vadd.f32 0.0, %v503
    %v505 = vpop.f32.mrf.mxu0
    %v506 = vadd.f32 0.0, %v505
    %507 = vmatmul.bf16.gmra.mxu0 %v350
    %v508 = vpop.f32.mrf.mxu0
    %v509 = vadd.f32 0.0, %v508
    %v510 = vpop.f32.mrf.mxu0
    %v511 = vadd.f32 0.0, %v510
    %512 = vmatmul.bf16.gmra.mxu0 %v353
    %v513 = vpop.f32.mrf.mxu0
    %v514 = vadd.f32 0.0, %v513
    %v515 = vpop.f32.mrf.mxu0
    %v516 = vadd.f32 0.0, %v515
    %517 = vmatmul.bf16.gmra.mxu0 %v356
    %v518 = vpop.f32.mrf.mxu0
    %v519 = vadd.f32 0.0, %v518
    %v520 = vpop.f32.mrf.mxu0
    %v521 = vadd.f32 0.0, %v520
    %522 = vmatmul.bf16.gmra.mxu0 %v359
    %v523 = vpop.f32.mrf.mxu0
    %v524 = vadd.f32 0.0, %v523
    %v525 = vpop.f32.mrf.mxu0
    %v526 = vadd.f32 0.0, %v525
    %527 = vmatmul.bf16.gmra.mxu0 %v362
    %v528 = vpop.f32.mrf.mxu0
    %v529 = vadd.f32 0.0, %v528
    %v530 = vpop.f32.mrf.mxu0
    %v531 = vadd.f32 0.0, %v530
    %532 = vmatmul.bf16.gmra.mxu0 %v365
    %v533 = vpop.f32.mrf.mxu0
    %v534 = vadd.f32 0.0, %v533
    %v535 = vpop.f32.mrf.mxu0
    %v536 = vadd.f32 0.0, %v535
    %537 = vmatmul.bf16.gmra.mxu0 %v368
    %v538 = vpop.f32.mrf.mxu0
    %v539 = vadd.f32 0.0, %v538
    %v540 = vpop.f32.mrf.mxu0
    %v541 = vadd.f32 0.0, %v540
    %542 = vdwg.mxu0
    %v543 = vpack.c.bf16 %v384, %v384
    %v544 = vpack.c.bf16 %v386, %v386
    %v545 = vpack.c.bf16 %v389, %v389
    %v546 = vpack.c.bf16 %v391, %v391
    %v547 = vpack.c.bf16 %v394, %v394
    %v548 = vpack.c.bf16 %v396, %v396
    %v549 = vpack.c.bf16 %v399, %v399
    %v550 = vpack.c.bf16 %v401, %v401
    %v551 = vpack.c.bf16 %v404, %v404
    %v552 = vpack.c.bf16 %v406, %v406
    %v553 = vpack.c.bf16 %v409, %v409
    %v554 = vpack.c.bf16 %v411, %v411
    %v555 = vpack.c.bf16 %v414, %v414
    %v556 = vpack.c.bf16 %v416, %v416
    %v557 = vpack.c.bf16 %v419, %v419
    %v558 = vpack.c.bf16 %v421, %v421
    %v559 = vpack.c.bf16 %v424, %v424
    %v560 = vpack.c.bf16 %v426, %v426
    %v561 = vpack.c.bf16 %v429, %v429
    %v562 = vpack.c.bf16 %v431, %v431
    %v563 = vpack.c.bf16 %v434, %v434
    %v564 = vpack.c.bf16 %v436, %v436
    %v565 = vpack.c.bf16 %v439, %v439
    %v566 = vpack.c.bf16 %v441, %v441
    %v567 = vpack.c.bf16 %v444, %v444
    %v568 = vpack.c.bf16 %v446, %v446
    %v569 = vpack.c.bf16 %v449, %v449
    %v570 = vpack.c.bf16 %v451, %v451
    %v571 = vpack.c.bf16 %v454, %v454
    %v572 = vpack.c.bf16 %v456, %v456
    %v573 = vpack.c.bf16 %v459, %v459
    %v574 = vpack.c.bf16 %v461, %v461
    %v575 = vpack.c.bf16 %v464, %v464
    %v576 = vpack.c.bf16 %v466, %v466
    %v577 = vpack.c.bf16 %v469, %v469
    %v578 = vpack.c.bf16 %v471, %v471
    %v579 = vpack.c.bf16 %v474, %v474
    %v580 = vpack.c.bf16 %v476, %v476
    %v581 = vpack.c.bf16 %v479, %v479
    %v582 = vpack.c.bf16 %v481, %v481
    %v583 = vpack.c.bf16 %v484, %v484
    %v584 = vpack.c.bf16 %v486, %v486
    %v585 = vpack.c.bf16 %v489, %v489
    %v586 = vpack.c.bf16 %v491, %v491
    %v587 = vpack.c.bf16 %v494, %v494
    %v588 = vpack.c.bf16 %v496, %v496
    %v589 = vpack.c.bf16 %v499, %v499
    %v590 = vpack.c.bf16 %v501, %v501
    %v591 = vpack.c.bf16 %v504, %v504
    %v592 = vpack.c.bf16 %v506, %v506
    %v593 = vpack.c.bf16 %v509, %v509
    %v594 = vpack.c.bf16 %v511, %v511
    %v595 = vpack.c.bf16 %v514, %v514
    %v596 = vpack.c.bf16 %v516, %v516
    %v597 = vpack.c.bf16 %v519, %v519
    %v598 = vpack.c.bf16 %v521, %v521
    %v599 = vpack.c.bf16 %v524, %v524
    %v600 = vpack.c.bf16 %v526, %v526
    %v601 = vpack.c.bf16 %v529, %v529
    %v602 = vpack.c.bf16 %v531, %v531
    %v603 = vpack.c.bf16 %v534, %v534
    %v604 = vpack.c.bf16 %v536, %v536
    %v605 = vpack.c.bf16 %v539, %v539
    %v606 = vpack.c.bf16 %v541, %v541
    %607 = vst [vmem:[#allocation4] sm:$0xf] %v543
    %608 = vst [vmem:[#allocation4 + $0x4] sm:$0xf] %v544
    %609 = vst [vmem:[#allocation4 + $0x8] sm:$0xf] %v545
    %610 = vst [vmem:[#allocation4 + $0xc] sm:$0xf] %v546
    %611 = vst [vmem:[#allocation4 + $0x10] sm:$0xf] %v547
    %612 = vst [vmem:[#allocation4 + $0x14] sm:$0xf] %v548
    %613 = vst [vmem:[#allocation4 + $0x18] sm:$0xf] %v549
    %614 = vst [vmem:[#allocation4 + $0x1c] sm:$0xf] %v550
    %615 = vst [vmem:[#allocation4 + $0x20] sm:$0xf] %v551
    %616 = vst [vmem:[#allocation4 + $0x24] sm:$0xf] %v552
    %617 = vst [vmem:[#allocation4 + $0x28] sm:$0xf] %v553
    %618 = vst [vmem:[#allocation4 + $0x2c] sm:$0xf] %v554
    %619 = vst [vmem:[#allocation4 + $0x30] sm:$0xf] %v555
    %620 = vst [vmem:[#allocation4 + $0x34] sm:$0xf] %v556
    %621 = vst [vmem:[#allocation4 + $0x38] sm:$0xf] %v557
    %622 = vst [vmem:[#allocation4 + $0x3c] sm:$0xf] %v558
    %623 = vst [vmem:[#allocation4 + $0x40] sm:$0xf] %v559
    %624 = vst [vmem:[#allocation4 + $0x44] sm:$0xf] %v560
    %625 = vst [vmem:[#allocation4 + $0x48] sm:$0xf] %v561
    %626 = vst [vmem:[#allocation4 + $0x4c] sm:$0xf] %v562
    %627 = vst [vmem:[#allocation4 + $0x50] sm:$0xf] %v563
    %628 = vst [vmem:[#allocation4 + $0x54] sm:$0xf] %v564
    %629 = vst [vmem:[#allocation4 + $0x58] sm:$0xf] %v565
    %630 = vst [vmem:[#allocation4 + $0x5c] sm:$0xf] %v566
    %631 = vst [vmem:[#allocation4 + $0x60] sm:$0xf] %v567
    %632 = vst [vmem:[#allocation4 + $0x64] sm:$0xf] %v568
    %633 = vst [vmem:[#allocation4 + $0x68] sm:$0xf] %v569
    %634 = vst [vmem:[#allocation4 + $0x6c] sm:$0xf] %v570
    %635 = vst [vmem:[#allocation4 + $0x70] sm:$0xf] %v571
    %636 = vst [vmem:[#allocation4 + $0x74] sm:$0xf] %v572
    %637 = vst [vmem:[#allocation4 + $0x78] sm:$0xf] %v573
    %638 = vst [vmem:[#allocation4 + $0x7c] sm:$0xf] %v574
    %639 = vst [vmem:[#allocation4 + $0x80] sm:$0xf] %v575
    %640 = vst [vmem:[#allocation4 + $0x84] sm:$0xf] %v576
    %641 = vst [vmem:[#allocation4 + $0x88] sm:$0xf] %v577
    %642 = vst [vmem:[#allocation4 + $0x8c] sm:$0xf] %v578
    %643 = vst [vmem:[#allocation4 + $0x90] sm:$0xf] %v579
    %644 = vst [vmem:[#allocation4 + $0x94] sm:$0xf] %v580
    %645 = vst [vmem:[#allocation4 + $0x98] sm:$0xf] %v581
    %646 = vst [vmem:[#allocation4 + $0x9c] sm:$0xf] %v582
    %647 = vst [vmem:[#allocation4 + $0xa0] sm:$0xf] %v583
    %648 = vst [vmem:[#allocation4 + $0xa4] sm:$0xf] %v584
    %649 = vst [vmem:[#allocation4 + $0xa8] sm:$0xf] %v585
    %650 = vst [vmem:[#allocation4 + $0xac] sm:$0xf] %v586
    %651 = vst [vmem:[#allocation4 + $0xb0] sm:$0xf] %v587
    %652 = vst [vmem:[#allocation4 + $0xb4] sm:$0xf] %v588
    %653 = vst [vmem:[#allocation4 + $0xb8] sm:$0xf] %v589
    %654 = vst [vmem:[#allocation4 + $0xbc] sm:$0xf] %v590
    %655 = vst [vmem:[#allocation4 + $0xc0] sm:$0xf] %v591
    %656 = vst [vmem:[#allocation4 + $0xc4] sm:$0xf] %v592
    %657 = vst [vmem:[#allocation4 + $0xc8] sm:$0xf] %v593
    %658 = vst [vmem:[#allocation4 + $0xcc] sm:$0xf] %v594
    %659 = vst [vmem:[#allocation4 + $0xd0] sm:$0xf] %v595
    %660 = vst [vmem:[#allocation4 + $0xd4] sm:$0xf] %v596
    %661 = vst [vmem:[#allocation4 + $0xd8] sm:$0xf] %v597
    %662 = vst [vmem:[#allocation4 + $0xdc] sm:$0xf] %v598
    %663 = vst [vmem:[#allocation4 + $0xe0] sm:$0xf] %v599
    %664 = vst [vmem:[#allocation4 + $0xe4] sm:$0xf] %v600
    %665 = vst [vmem:[#allocation4 + $0xe8] sm:$0xf] %v601
    %666 = vst [vmem:[#allocation4 + $0xec] sm:$0xf] %v602
    %667 = vst [vmem:[#allocation4 + $0xf0] sm:$0xf] %v603
    %668 = vst [vmem:[#allocation4 + $0xf4] sm:$0xf] %v604
    %669 = vst [vmem:[#allocation4 + $0xf8] sm:$0xf] %v605
    %670 = vst [vmem:[#allocation4 + $0xfc] sm:$0xf] %v606
    %v671 = vld [vmem:[#allocation2] sm:$0x1]
    %672 = vmatpush.msra.mxu0 %v421
    %673 = vmatpush.msra.mxu0 %v419
    %674 = vmatpush.msra.mxu0 %v416
    %675 = vmatpush.msra.mxu0 %v414
    %676 = vmatpush.msra.mxu0 %v411
    %677 = vmatpush.msra.mxu0 %v409
    %678 = vmatpush.msra.mxu0 %v406
    %679 = vmatpush.msra.mxu0 %v404
    %680 = vmatpush.msra.mxu0 %v401
    %681 = vmatpush.msra.mxu0 %v399
    %682 = vmatpush.msra.mxu0 %v396
    %683 = vmatpush.msra.mxu0 %v394
    %684 = vmatpush.msra.mxu0 %v391
    %685 = vmatpush.msra.mxu0 %v389
    %686 = vmatpush.msra.mxu0 %v386
    %687 = vmatpush.msra.mxu0 %v384
    %688 = vmatmul.f32.gmra.mxu0 1.0
    %v689 = vpop.f32.mrf.mxu0
    %v690 = vadd.f32 0.0, %v689
    %691 = vdwg.mxu0
    %692 = vmatpush.msra.mxu0 %v461
    %693 = vmatpush.msra.mxu0 %v459
    %694 = vmatpush.msra.mxu0 %v456
    %695 = vmatpush.msra.mxu0 %v454
    %696 = vmatpush.msra.mxu0 %v451
    %697 = vmatpush.msra.mxu0 %v449
    %698 = vmatpush.msra.mxu0 %v446
    %699 = vmatpush.msra.mxu0 %v444
    %700 = vmatpush.msra.mxu0 %v441
    %701 = vmatpush.msra.mxu0 %v439
    %702 = vmatpush.msra.mxu0 %v436
    %703 = vmatpush.msra.mxu0 %v434
    %704 = vmatpush.msra.mxu0 %v431
    %705 = vmatpush.msra.mxu0 %v429
    %706 = vmatpush.msra.mxu0 %v426
    %707 = vmatpush.msra.mxu0 %v424
    %708 = vmatmul.f32.gmra.mxu0 1.0
    %v709 = vpop.f32.mrf.mxu0
    %v710 = vadd.f32 %v690, %v709
    %711 = vdwg.mxu0
    %712 = vmatpush.msra.mxu0 %v501
    %713 = vmatpush.msra.mxu0 %v499
    %714 = vmatpush.msra.mxu0 %v496
    %715 = vmatpush.msra.mxu0 %v494
    %716 = vmatpush.msra.mxu0 %v491
    %717 = vmatpush.msra.mxu0 %v489
    %718 = vmatpush.msra.mxu0 %v486
    %719 = vmatpush.msra.mxu0 %v484
    %720 = vmatpush.msra.mxu0 %v481
    %721 = vmatpush.msra.mxu0 %v479
    %722 = vmatpush.msra.mxu0 %v476
    %723 = vmatpush.msra.mxu0 %v474
    %724 = vmatpush.msra.mxu0 %v471
    %725 = vmatpush.msra.mxu0 %v469
    %726 = vmatpush.msra.mxu0 %v466
    %727 = vmatpush.msra.mxu0 %v464
    %728 = vmatmul.f32.gmra.mxu0 1.0
    %v729 = vpop.f32.mrf.mxu0
    %v730 = vadd.f32 %v710, %v729
    %731 = vdwg.mxu0
    %732 = vmatpush.msra.mxu0 %v541
    %733 = vmatpush.msra.mxu0 %v539
    %734 = vmatpush.msra.mxu0 %v536
    %735 = vmatpush.msra.mxu0 %v534
    %736 = vmatpush.msra.mxu0 %v531
    %737 = vmatpush.msra.mxu0 %v529
    %738 = vmatpush.msra.mxu0 %v526
    %739 = vmatpush.msra.mxu0 %v524
    %740 = vmatpush.msra.mxu0 %v521
    %741 = vmatpush.msra.mxu0 %v519
    %742 = vmatpush.msra.mxu0 %v516
    %743 = vmatpush.msra.mxu0 %v514
    %744 = vmatpush.msra.mxu0 %v511
    %745 = vmatpush.msra.mxu0 %v509
    %746 = vmatpush.msra.mxu0 %v506
    %747 = vmatpush.msra.mxu0 %v504
    %748 = vmatmul.f32.gmra.mxu0 1.0
    %v749 = vpop.f32.mrf.mxu0
    %v750 = vadd.f32 %v730, %v749
    %751 = vdwg.mxu0
    %v752 = vadd.f32 %v671, %v750
    %753 = vst [vmem:[#allocation2] sm:$0x1] %v752
    %v754 = vld [vmem:[#allocation3] sm:$0x1]
    %v755 = vmul.f32 %v384, %v384
    %v756 = vmul.f32 %v386, %v386
    %v757 = vmul.f32 %v389, %v389
    %v758 = vmul.f32 %v391, %v391
    %v759 = vmul.f32 %v394, %v394
    %v760 = vmul.f32 %v396, %v396
    %v761 = vmul.f32 %v399, %v399
    %v762 = vmul.f32 %v401, %v401
    %v763 = vmul.f32 %v404, %v404
    %v764 = vmul.f32 %v406, %v406
    %v765 = vmul.f32 %v409, %v409
    %v766 = vmul.f32 %v411, %v411
    %v767 = vmul.f32 %v414, %v414
    %v768 = vmul.f32 %v416, %v416
    %v769 = vmul.f32 %v419, %v419
    %v770 = vmul.f32 %v421, %v421
    %v771 = vmul.f32 %v424, %v424
    %v772 = vmul.f32 %v426, %v426
    %v773 = vmul.f32 %v429, %v429
    %v774 = vmul.f32 %v431, %v431
    %v775 = vmul.f32 %v434, %v434
    %v776 = vmul.f32 %v436, %v436
    %v777 = vmul.f32 %v439, %v439
    %v778 = vmul.f32 %v441, %v441
    %v779 = vmul.f32 %v444, %v444
    %v780 = vmul.f32 %v446, %v446
    %v781 = vmul.f32 %v449, %v449
    %v782 = vmul.f32 %v451, %v451
    %v783 = vmul.f32 %v454, %v454
    %v784 = vmul.f32 %v456, %v456
    %v785 = vmul.f32 %v459, %v459
    %v786 = vmul.f32 %v461, %v461
    %v787 = vmul.f32 %v464, %v464
    %v788 = vmul.f32 %v466, %v466
    %v789 = vmul.f32 %v469, %v469
    %v790 = vmul.f32 %v471, %v471
    %v791 = vmul.f32 %v474, %v474
    %v792 = vmul.f32 %v476, %v476
    %v793 = vmul.f32 %v479, %v479
    %v794 = vmul.f32 %v481, %v481
    %v795 = vmul.f32 %v484, %v484
    %v796 = vmul.f32 %v486, %v486
    %v797 = vmul.f32 %v489, %v489
    %v798 = vmul.f32 %v491, %v491
    %v799 = vmul.f32 %v494, %v494
    %v800 = vmul.f32 %v496, %v496
    %v801 = vmul.f32 %v499, %v499
    %v802 = vmul.f32 %v501, %v501
    %v803 = vmul.f32 %v504, %v504
    %v804 = vmul.f32 %v506, %v506
    %v805 = vmul.f32 %v509, %v509
    %v806 = vmul.f32 %v511, %v511
    %v807 = vmul.f32 %v514, %v514
    %v808 = vmul.f32 %v516, %v516
    %v809 = vmul.f32 %v519, %v519
    %v810 = vmul.f32 %v521, %v521
    %v811 = vmul.f32 %v524, %v524
    %v812 = vmul.f32 %v526, %v526
    %v813 = vmul.f32 %v529, %v529
    %v814 = vmul.f32 %v531, %v531
    %v815 = vmul.f32 %v534, %v534
    %v816 = vmul.f32 %v536, %v536
    %v817 = vmul.f32 %v539, %v539
    %v818 = vmul.f32 %v541, %v541
    %819 = vmatpush.msra.mxu0 %v770
    %820 = vmatpush.msra.mxu0 %v769
    %821 = vmatpush.msra.mxu0 %v768
    %822 = vmatpush.msra.mxu0 %v767
    %823 = vmatpush.msra.mxu0 %v766
    %824 = vmatpush.msra.mxu0 %v765
    %825 = vmatpush.msra.mxu0 %v764
    %826 = vmatpush.msra.mxu0 %v763
    %827 = vmatpush.msra.mxu0 %v762
    %828 = vmatpush.msra.mxu0 %v761
    %829 = vmatpush.msra.mxu0 %v760
    %830 = vmatpush.msra.mxu0 %v759
    %831 = vmatpush.msra.mxu0 %v758
    %832 = vmatpush.msra.mxu0 %v757
    %833 = vmatpush.msra.mxu0 %v756
    %834 = vmatpush.msra.mxu0 %v755
    %835 = vmatmul.f32.gmra.mxu0 1.0
    %v836 = vpop.f32.mrf.mxu0
    %v837 = vadd.f32 0.0, %v836
    %838 = vdwg.mxu0
    %839 = vmatpush.msra.mxu0 %v786
    %840 = vmatpush.msra.mxu0 %v785
    %841 = vmatpush.msra.mxu0 %v784
    %842 = vmatpush.msra.mxu0 %v783
    %843 = vmatpush.msra.mxu0 %v782
    %844 = vmatpush.msra.mxu0 %v781
    %845 = vmatpush.msra.mxu0 %v780
    %846 = vmatpush.msra.mxu0 %v779
    %847 = vmatpush.msra.mxu0 %v778
    %848 = vmatpush.msra.mxu0 %v777
    %849 = vmatpush.msra.mxu0 %v776
    %850 = vmatpush.msra.mxu0 %v775
    %851 = vmatpush.msra.mxu0 %v774
    %852 = vmatpush.msra.mxu0 %v773
    %853 = vmatpush.msra.mxu0 %v772
    %854 = vmatpush.msra.mxu0 %v771
    %855 = vmatmul.f32.gmra.mxu0 1.0
    %v856 = vpop.f32.mrf.mxu0
    %v857 = vadd.f32 %v837, %v856
    %858 = vdwg.mxu0
    %859 = vmatpush.msra.mxu0 %v802
    %860 = vmatpush.msra.mxu0 %v801
    %861 = vmatpush.msra.mxu0 %v800
    %862 = vmatpush.msra.mxu0 %v799
    %863 = vmatpush.msra.mxu0 %v798
    %864 = vmatpush.msra.mxu0 %v797
    %865 = vmatpush.msra.mxu0 %v796
    %866 = vmatpush.msra.mxu0 %v795
    %867 = vmatpush.msra.mxu0 %v794
    %868 = vmatpush.msra.mxu0 %v793
    %869 = vmatpush.msra.mxu0 %v792
    %870 = vmatpush.msra.mxu0 %v791
    %871 = vmatpush.msra.mxu0 %v790
    %872 = vmatpush.msra.mxu0 %v789
    %873 = vmatpush.msra.mxu0 %v788
    %874 = vmatpush.msra.mxu0 %v787
    %875 = vmatmul.f32.gmra.mxu0 1.0
    %v876 = vpop.f32.mrf.mxu0
    %v877 = vadd.f32 %v857, %v876
    %878 = vdwg.mxu0
    %879 = vmatpush.msra.mxu0 %v818
    %880 = vmatpush.msra.mxu0 %v817
    %881 = vmatpush.msra.mxu0 %v816
    %882 = vmatpush.msra.mxu0 %v815
    %883 = vmatpush.msra.mxu0 %v814
    %884 = vmatpush.msra.mxu0 %v813
    %885 = vmatpush.msra.mxu0 %v812
    %886 = vmatpush.msra.mxu0 %v811
    %887 = vmatpush.msra.mxu0 %v810
    %888 = vmatpush.msra.mxu0 %v809
    %889 = vmatpush.msra.mxu0 %v808
    %890 = vmatpush.msra.mxu0 %v807
    %891 = vmatpush.msra.mxu0 %v806
    %892 = vmatpush.msra.mxu0 %v805
    %893 = vmatpush.msra.mxu0 %v804
    %894 = vmatpush.msra.mxu0 %v803
    %895 = vmatmul.f32.gmra.mxu0 1.0
    %v896 = vpop.f32.mrf.mxu0
    %v897 = vadd.f32 %v877, %v896
    %898 = vdwg.mxu0
    %v899 = vadd.f32 %v754, %v897
    %900 = vst [vmem:[#allocation3] sm:$0x1] %v899
    // Predicated region
    $region22: #{tpu_custom_call.1} parent=1 // pred_check
      %p901 = pneg %p23
    $region23: #{tpu_custom_call.1} parent=1 // pred_check_branch
      %903 = sbr.rel (%p901) target = $region25
    $region24: #{tpu_custom_call.1} parent=1 // pred_region
      %v904 = vld [vmem:[#allocation2] sm:$0x1]
      %v905 = vmul.f32 %v904, 0.001953125
      %v906 = vld [vmem:[#allocation3] sm:$0x1]
      %v907 = vmul.f32 %v906, 0.001953125
      %v908 = vmul.f32 %v905, %v905
      %v909 = vsub.f32 %v907, %v908
      %v910 = vmax.f32 %v909, 0.0
      %v911 = vadd.f32 %v910, 1e-05
      %v912 = vrsqrt.pop %v911
      %v913 = vmul.f32 %v912, %v911
      %v914 = vmul.f32 %v913, %v912
      %v915 = vmul.f32 0.5, %v914
      %v916 = vsub.f32 1.5, %v915
      %v917 = vmul.f32 %v912, %v916
      %vm918 = vweird.f32 %v911
      %vm919 = vweird.f32 %v912
      %vm920 = vmor %vm918, %vm919
      %v921 = vsel %vm920, %v912, %v917
      %v922 = vld [vmem:[%s2] sm:$0x1]
      %v923 = vmul.f32 %v922, %v921
      %924 = vst [vmem:[#allocation6] sm:$0x1] %v923
      %v925 = vld [vmem:[%s3] sm:$0x1]
      %v926 = vmul.f32 %v905, %v923
      %v927 = vsub.f32 %v925, %v926
      %928 = vst [vmem:[#allocation8] sm:$0x1] %v927
    $region25: #{tpu_custom_call.1} parent=1 // pred_fallthru
      _
    // Predicated region
    $region26: #{tpu_custom_call.1} parent=1 // pred_check
      _
    $region27: #{tpu_custom_call.1} parent=1 // pred_check_branch
      %930 = sbr.rel (0) target = $region29
    $region28: #{tpu_custom_call.1} parent=1 // pred_region
      %932 = vsyncadd [#allocation5], 0
      %s933 = sshll.u32 [#allocation4], 4
      %s934 = int_to_ptr.vmem [resolvable:$true] %s933
      %s935 = sshll.u32 %s4, 4
      %s936 = int_to_ptr.hbm [resolvable:$true] %s935
      %941 = dma.vmem_to_hbm [thread:$0]  %s934, 4096, %s936, [#allocation5], 64, 64, 4
    $region29: #{tpu_custom_call.1} parent=1 // pred_fallthru
      _
    // Predicated region
    $region30: #{tpu_custom_call.1} parent=1 // pred_check
      _
    $region31: #{tpu_custom_call.1} parent=1 // pred_check_branch
      %943 = sbr.rel (0) target = $region33
    $region32: #{tpu_custom_call.1} parent=1 // pred_region
      %945 = vsyncadd [#allocation7], 0
      %s947 = sshll.u32 [#allocation6], 4
      %s948 = int_to_ptr.vmem [resolvable:$true] %s947
      %s949 = sshll.u32 %s5, 4
      %s950 = int_to_ptr.hbm [resolvable:$true] %s949
      %952 = dma.vmem_to_hbm [thread:$0]  %s948, 16, %s950, [#allocation7]
    $region33: #{tpu_custom_call.1} parent=1 // pred_fallthru
      _
    // Predicated region
    $region34: #{tpu_custom_call.1} parent=1 // pred_check
      _
    $region35: #{tpu_custom_call.1} parent=1 // pred_check_branch
      %954 = sbr.rel (0) target = $region37
    $region36: #{tpu_custom_call.1} parent=1 // pred_region
      %956 = vsyncadd [#allocation7], 0
      %s958 = sshll.u32 [#allocation8], 4
      %s959 = int_to_ptr.vmem [resolvable:$true] %s958
      %s960 = sshll.u32 %s6, 4
      %s961 = int_to_ptr.hbm [resolvable:$true] %s960
      %963 = dma.vmem_to_hbm [thread:$0]  %s959, 16, %s961, [#allocation7]
    $region37: #{tpu_custom_call.1} parent=1 // pred_fallthru
      _
    // Predicated region
    $region38: #{tpu_custom_call.1} parent=1 // pred_check
      _
    $region39: #{tpu_custom_call.1} parent=1 // pred_check_branch
      %965 = sbr.rel (0) target = $region41
    $region40: #{tpu_custom_call.1} parent=1 // pred_region
      %967 = dma.done [#allocation5], 4096
    $region41: #{tpu_custom_call.1} parent=1 // pred_fallthru
      _
    // Predicated region
    $region42: #{tpu_custom_call.1} parent=1 // pred_check
      _
    $region43: #{tpu_custom_call.1} parent=1 // pred_check_branch
      %969 = sbr.rel (0) target = $region45
    $region44: #{tpu_custom_call.1} parent=1 // pred_region
      %971 = dma.done [#allocation7], 16
    $region45: #{tpu_custom_call.1} parent=1 // pred_fallthru
      _
    // Predicated region
    $region46: #{tpu_custom_call.1} parent=1 // pred_check
      _
    $region47: #{tpu_custom_call.1} parent=1 // pred_check_branch
      %973 = sbr.rel (0) target = $region49
    $region48: #{tpu_custom_call.1} parent=1 // pred_region
      %975 = dma.done [#allocation7], 16
    $region49: #{tpu_custom_call.1} parent=1 // pred_fallthru
      _
    %976 = vsyncpa [#allocation5], 1
    %977 = vsyncpa [#allocation7], 1

</llo_original>
